<compile_context>
chip_gen: v7x
topology: tpu7x:2x2x1
jax: 0.10.0
libtpu: 0.0.40
codegen_flags: <defaults>
</compile_context>

<pallas_src>
import jax
import jax.numpy as jnp
from jax.experimental import pallas as pl
from jax.experimental.pallas import tpu as pltpu

IN_FEATURES = 1024
OUT_FEATURES = 10


def _round_up(n, m):
    return ((n + m - 1) // m) * m


def _linear_logsoftmax_kernel(x_ref, w_ref, b_ref, o_ref):
    # MXU matmul with f32 accumulation + numerically-stable log-softmax.
    logits = jnp.dot(x_ref[...], w_ref[...],
                     preferred_element_type=jnp.float32)
    logits = logits + b_ref[...].astype(jnp.float32)
    m = jnp.max(logits, axis=-1, keepdims=True)
    shifted = logits - m
    lse = jnp.log(jnp.sum(jnp.exp(shifted), axis=-1, keepdims=True))
    o_ref[...] = (shifted - lse).astype(o_ref.dtype)


def derived_model14_forward(x, w, b, *, tb=512):
    """x: (B, 1024), w: (1024, 10), b: (1, 10) -> (B, 10) f32.

    x / w may be f32 or bf16; accumulation and softmax are always f32.
    """
    B = x.shape[0]
    # Batch tile: multiple of 8 (sublane), capped at `tb`. With K=1024 the
    # per-buffer footprint at tb=512 is 2 MiB f32 (1 MiB bf16), so the
    # double-buffered pipeline fits comfortably under every chip's default
    # scoped-VMEM limit (v5e 16 MiB, v6e/v7x 32 MiB) — no vmem_limit override.
    tb_eff = min(tb, _round_up(B, 8))
    padded_b = _round_up(B, tb_eff)
    if padded_b != B:
        x = jnp.pad(x, ((0, padded_b - B), (0, 0)))

    grid = (padded_b // tb_eff,)
    out = pl.pallas_call(
        _linear_logsoftmax_kernel,
        out_shape=jax.ShapeDtypeStruct((padded_b, OUT_FEATURES), jnp.float32),
        grid_spec=pltpu.PrefetchScalarGridSpec(
            num_scalar_prefetch=0,
            grid=grid,
            in_specs=[
                # x: one batch tile per grid step (pipelined).
                pl.BlockSpec((tb_eff, IN_FEATURES), lambda i: (i, 0)),
                # w, b: constant index map -> stay resident in VMEM.
                pl.BlockSpec((IN_FEATURES, OUT_FEATURES), lambda i: (0, 0)),
                pl.BlockSpec((1, OUT_FEATURES), lambda i: (0, 0)),
            ],
            out_specs=pl.BlockSpec((tb_eff, OUT_FEATURES), lambda i: (i, 0)),
        ),
        compiler_params=pltpu.CompilerParams(
            # Batch tiles are independent -> parallel (2 TCs on v7x).
            dimension_semantics=("parallel",)),
    )(x, w, b)

    if padded_b != B:
        out = out[:B]
    return out


def reference_forward(x, w, b):
    logits = x.astype(jnp.float32) @ w.astype(jnp.float32) + b.astype(jnp.float32)
    return jax.nn.log_softmax(logits, axis=1)


if __name__ == "__main__":
    key = jax.random.PRNGKey(0)
    kx, kw, kb, kx2 = jax.random.split(key, 4)

    # Deterministic parameter init mimicking nn.Linear default:
    # U(-1/sqrt(in_features), 1/sqrt(in_features))
    bound = 1.0 / (IN_FEATURES ** 0.5)
    w = jax.random.uniform(kw, (IN_FEATURES, OUT_FEATURES), jnp.float32,
                           minval=-bound, maxval=bound)
    b = jax.random.uniform(kb, (1, OUT_FEATURES), jnp.float32,
                           minval=-bound, maxval=bound)

    # --- Check 1: small batch, f32, tight tolerance ---
    B1 = 8
    x1 = jax.random.normal(kx, (B1, IN_FEATURES), dtype=jnp.float32)
    out1 = jax.block_until_ready(derived_model14_forward(x1, w, b))
    ref1 = reference_forward(x1, w, b)
    assert out1.shape == (B1, OUT_FEATURES)
    assert jnp.allclose(out1, ref1, atol=1e-4, rtol=1e-4)

    # --- Check 2: larger batch exercising tiling + padding, bf16 inputs ---
    B2 = 600  # not a multiple of the 512 tile -> padded remainder tile
    x2 = jax.random.normal(kx2, (B2, IN_FEATURES), dtype=jnp.float32)
    out2 = jax.block_until_ready(
        derived_model14_forward(x2.astype(jnp.bfloat16),
                                w.astype(jnp.bfloat16), b))
    ref2 = reference_forward(x2, w, b)
    assert out2.shape == (B2, OUT_FEATURES)
    assert jnp.allclose(out2, ref2, atol=3e-2, rtol=3e-2)

    print("KERNEL_OK")
</pallas_src>

<mosaic_0001>
module attributes {stable_mosaic.version = 11 : i64} {
  func.func @_linear_logsoftmax_kernel(%arg0: i32, %arg1: memref<8x1024xf32, #tpu.memory_space<vmem>>, %arg2: memref<1024x10xf32, #tpu.memory_space<vmem>>, %arg3: memref<1x10xf32, #tpu.memory_space<vmem>>, %arg4: memref<8x10xf32, #tpu.memory_space<vmem>>) attributes {dimension_semantics = [#tpu.dimension_semantics<parallel>], iteration_bounds = array<i64: 1>, scalar_prefetch = 0 : i64, scratch_operands = 0 : i64, tpu.core_type = #tpu.core_type<tc>, window_params = [{transform_indices = @transform_0, window_bounds = array<i64: 8, 1024>}, {pipeline_mode = #tpu.pipeline_mode<synchronous>, transform_indices = @transform_1, window_bounds = array<i64: 1024, 10>}, {pipeline_mode = #tpu.pipeline_mode<synchronous>, transform_indices = @transform_2, window_bounds = array<i64: 1, 10>}, {transform_indices = @transform_3, window_bounds = array<i64: 8, 10>}]} {
    %c0 = arith.constant 0 : index
    %c0_0 = arith.constant 0 : index
    %0 = vector.load %arg1[%c0, %c0_0] : memref<8x1024xf32, #tpu.memory_space<vmem>>, vector<8x1024xf32>
    %c0_1 = arith.constant 0 : index
    %c0_2 = arith.constant 0 : index
    %1 = vector.load %arg2[%c0_1, %c0_2] : memref<1024x10xf32, #tpu.memory_space<vmem>>, vector<1024x10xf32>
    %cst = arith.constant dense<0.000000e+00> : vector<8x10xf32>
    %2 = tpu.matmul %0, %1, %cst {dimension_numbers = #tpu.dot_dimension_numbers<[1], [0], [0], [1], [0, 0, 1, 1], [], []>} : vector<8x1024xf32>, vector<1024x10xf32>, vector<8x10xf32> -> vector<8x10xf32>
    %c0_3 = arith.constant 0 : index
    %c0_4 = arith.constant 0 : index
    %3 = vector.load %arg3[%c0_3, %c0_4] : memref<1x10xf32, #tpu.memory_space<vmem>>, vector<1x10xf32>
    %4 = vector.broadcast %3 : vector<1x10xf32> to vector<8x10xf32>
    %5 = arith.addf %2, %4 : vector<8x10xf32>
    %cst_5 = arith.constant dense<0xFF800000> : vector<8xf32>
    %6 = vector.multi_reduction <maximumf>, %5, %cst_5 [1] : vector<8x10xf32> to vector<8xf32>
    %7 = vector.shape_cast %6 : vector<8xf32> to vector<8x1xf32>
    %8 = vector.broadcast %7 : vector<8x1xf32> to vector<8x10xf32>
    %9 = arith.subf %5, %8 : vector<8x10xf32>
    %10 = math.exp %9 : vector<8x10xf32>
    %cst_6 = arith.constant dense<0.000000e+00> : vector<8xf32>
    %11 = vector.multi_reduction <add>, %10, %cst_6 [1] : vector<8x10xf32> to vector<8xf32>
    %12 = vector.shape_cast %11 : vector<8xf32> to vector<8x1xf32>
    %13 = math.log %12 : vector<8x1xf32>
    %14 = vector.broadcast %13 : vector<8x1xf32> to vector<8x10xf32>
    %15 = arith.subf %9, %14 : vector<8x10xf32>
    %c0_7 = arith.constant 0 : index
    %c0_8 = arith.constant 0 : index
    %16 = vector.load %arg4[%c0_7, %c0_8] : memref<8x10xf32, #tpu.memory_space<vmem>>, vector<8x10xf32>
    tpu.vector_store %arg4[%c0_7, %c0_8], %15 {strides = array<i32>} : memref<8x10xf32, #tpu.memory_space<vmem>>, vector<8x10xf32>,
    return
  }
  func.func @transform_0(%arg0: i32) -> (i32, i32) {
    %c0_i32 = arith.constant 0 : i32
    %c0_i32_0 = arith.constant 0 : i32
    return %arg0, %c0_i32 : i32, i32
  }
  func.func @transform_1(%arg0: i32) -> (i32, i32) {
    %c0_i32 = arith.constant 0 : i32
    %c0_i32_0 = arith.constant 0 : i32
    %c0_i32_1 = arith.constant 0 : i32
    return %c0_i32, %c0_i32_0 : i32, i32
  }
  func.func @transform_2(%arg0: i32) -> (i32, i32) {
    %c0_i32 = arith.constant 0 : i32
    %c0_i32_0 = arith.constant 0 : i32
    %c0_i32_1 = arith.constant 0 : i32
    return %c0_i32, %c0_i32_0 : i32, i32
  }
  func.func @transform_3(%arg0: i32) -> (i32, i32) {
    %c0_i32 = arith.constant 0 : i32
    %c0_i32_0 = arith.constant 0 : i32
    return %arg0, %c0_i32 : i32, i32
  }
}

</mosaic_0001>

<llo_original>
// kernel: tpu_custom_call.1
$region0: #{tpu_custom_call.1}
  #allocation0 [shape = 'u32[]', space=smem, size = 0x4, offset = 0x4, fixed_abs, tag = 'smem constant byte address 0x4 - core index']
  #allocation1 [shape = 'u32[144,128]{1,0:T(1,128)}', space=vmem, size = 0x12000, scoped, tag = 'internal scratch']
  %s0 = inlined_call_operand.vmem [shape: f32[8,1024], index: 0, kind: input, shape index: {}]
  %s1 = inlined_call_operand.vmem [shape: f32[1024,10], index: 1, kind: input, shape index: {}]
  %s2 = inlined_call_operand.vmem [shape: f32[1,10], index: 2, kind: input, shape index: {}]
  %s3 = inlined_call_operand.hbm [shape: f32[8,10], index: 3, kind: output, shape index: {}]
  %s4 = sld [smem:[#allocation0]]
  $region22: #{tpu_custom_call.1} parent=0
    _
  %s6 = ssub.s32 1, %s4
  %s7 = scalar_select 0, %s6, %s4
  $region1: #{tpu_custom_call.1} parent=0
    #allocation2 [shape = 'u8[4096]{0}', space=vmem, size = 0x1000, scoped, tag = 'output window, operand 0, single buffered']
    #allocation3 [shape = 's32[1]{0}', space=sflag, size = 0x4, scoped, tag = 'scoped memory for tpu_custom_call.1']
    %8 = vsyncpa [#allocation3], 0
    // Predicated region
    $region2: #{tpu_custom_call.1} parent=1 // pred_check
      _
    $region3: #{tpu_custom_call.1} parent=1 // pred_check_branch
      %10 = sbr.rel (0) target = $region5
    $region4: #{tpu_custom_call.1} parent=1 // pred_region
      _
    $region5: #{tpu_custom_call.1} parent=1 // pred_fallthru
      _
    // Predicated region
    $region6: #{tpu_custom_call.1} parent=1 // pred_check
      _
    $region7: #{tpu_custom_call.1} parent=1 // pred_check_branch
      %12 = sbr.rel (0) target = $region9
    $region8: #{tpu_custom_call.1} parent=1 // pred_region
      _
    $region9: #{tpu_custom_call.1} parent=1 // pred_fallthru
      _
    // Predicated region
    $region10: #{tpu_custom_call.1} parent=1 // pred_check
      _
    $region11: #{tpu_custom_call.1} parent=1 // pred_check_branch
      %14 = sbr.rel (0) target = $region13
    $region12: #{tpu_custom_call.1} parent=1 // pred_region
      _
    $region13: #{tpu_custom_call.1} parent=1 // pred_fallthru
      _
    %v15 = vld [vmem:[%s0] sm:$0xff]
    %v16 = vld [vmem:[%s0 + $0x8] sm:$0xff]
    %v17 = vld [vmem:[%s0 + $0x10] sm:$0xff]
    %v18 = vld [vmem:[%s0 + $0x18] sm:$0xff]
    %v19 = vld [vmem:[%s0 + $0x20] sm:$0xff]
    %v20 = vld [vmem:[%s0 + $0x28] sm:$0xff]
    %v21 = vld [vmem:[%s0 + $0x30] sm:$0xff]
    %v22 = vld [vmem:[%s0 + $0x38] sm:$0xff]
    %v23 = vld [vmem:[%s1] sm:$0xff]
    %v24 = vld [vmem:[%s1 + $0x8] sm:$0xff]
    %v25 = vld [vmem:[%s1 + $0x10] sm:$0xff]
    %v26 = vld [vmem:[%s1 + $0x18] sm:$0xff]
    %v27 = vld [vmem:[%s1 + $0x20] sm:$0xff]
    %v28 = vld [vmem:[%s1 + $0x28] sm:$0xff]
    %v29 = vld [vmem:[%s1 + $0x30] sm:$0xff]
    %v30 = vld [vmem:[%s1 + $0x38] sm:$0xff]
    %v31 = vld [vmem:[%s1 + $0x40] sm:$0xff]
    %v32 = vld [vmem:[%s1 + $0x48] sm:$0xff]
    %v33 = vld [vmem:[%s1 + $0x50] sm:$0xff]
    %v34 = vld [vmem:[%s1 + $0x58] sm:$0xff]
    %v35 = vld [vmem:[%s1 + $0x60] sm:$0xff]
    %v36 = vld [vmem:[%s1 + $0x68] sm:$0xff]
    %v37 = vld [vmem:[%s1 + $0x70] sm:$0xff]
    %v38 = vld [vmem:[%s1 + $0x78] sm:$0xff]
    %v39 = vld [vmem:[%s1 + $0x80] sm:$0xff]
    %v40 = vld [vmem:[%s1 + $0x88] sm:$0xff]
    %v41 = vld [vmem:[%s1 + $0x90] sm:$0xff]
    %v42 = vld [vmem:[%s1 + $0x98] sm:$0xff]
    %v43 = vld [vmem:[%s1 + $0xa0] sm:$0xff]
    %v44 = vld [vmem:[%s1 + $0xa8] sm:$0xff]
    %v45 = vld [vmem:[%s1 + $0xb0] sm:$0xff]
    %v46 = vld [vmem:[%s1 + $0xb8] sm:$0xff]
    %v47 = vld [vmem:[%s1 + $0xc0] sm:$0xff]
    %v48 = vld [vmem:[%s1 + $0xc8] sm:$0xff]
    %v49 = vld [vmem:[%s1 + $0xd0] sm:$0xff]
    %v50 = vld [vmem:[%s1 + $0xd8] sm:$0xff]
    %v51 = vld [vmem:[%s1 + $0xe0] sm:$0xff]
    %v52 = vld [vmem:[%s1 + $0xe8] sm:$0xff]
    %v53 = vld [vmem:[%s1 + $0xf0] sm:$0xff]
    %v54 = vld [vmem:[%s1 + $0xf8] sm:$0xff]
    %v55 = vld [vmem:[%s1 + $0x100] sm:$0xff]
    %v56 = vld [vmem:[%s1 + $0x108] sm:$0xff]
    %v57 = vld [vmem:[%s1 + $0x110] sm:$0xff]
    %v58 = vld [vmem:[%s1 + $0x118] sm:$0xff]
    %v59 = vld [vmem:[%s1 + $0x120] sm:$0xff]
    %v60 = vld [vmem:[%s1 + $0x128] sm:$0xff]
    %v61 = vld [vmem:[%s1 + $0x130] sm:$0xff]
    %v62 = vld [vmem:[%s1 + $0x138] sm:$0xff]
    %v63 = vld [vmem:[%s1 + $0x140] sm:$0xff]
    %v64 = vld [vmem:[%s1 + $0x148] sm:$0xff]
    %v65 = vld [vmem:[%s1 + $0x150] sm:$0xff]
    %v66 = vld [vmem:[%s1 + $0x158] sm:$0xff]
    %v67 = vld [vmem:[%s1 + $0x160] sm:$0xff]
    %v68 = vld [vmem:[%s1 + $0x168] sm:$0xff]
    %v69 = vld [vmem:[%s1 + $0x170] sm:$0xff]
    %v70 = vld [vmem:[%s1 + $0x178] sm:$0xff]
    %v71 = vld [vmem:[%s1 + $0x180] sm:$0xff]
    %v72 = vld [vmem:[%s1 + $0x188] sm:$0xff]
    %v73 = vld [vmem:[%s1 + $0x190] sm:$0xff]
    %v74 = vld [vmem:[%s1 + $0x198] sm:$0xff]
    %v75 = vld [vmem:[%s1 + $0x1a0] sm:$0xff]
    %v76 = vld [vmem:[%s1 + $0x1a8] sm:$0xff]
    %v77 = vld [vmem:[%s1 + $0x1b0] sm:$0xff]
    %v78 = vld [vmem:[%s1 + $0x1b8] sm:$0xff]
    %v79 = vld [vmem:[%s1 + $0x1c0] sm:$0xff]
    %v80 = vld [vmem:[%s1 + $0x1c8] sm:$0xff]
    %v81 = vld [vmem:[%s1 + $0x1d0] sm:$0xff]
    %v82 = vld [vmem:[%s1 + $0x1d8] sm:$0xff]
    %v83 = vld [vmem:[%s1 + $0x1e0] sm:$0xff]
    %v84 = vld [vmem:[%s1 + $0x1e8] sm:$0xff]
    %v85 = vld [vmem:[%s1 + $0x1f0] sm:$0xff]
    %v86 = vld [vmem:[%s1 + $0x1f8] sm:$0xff]
    %v87 = vld [vmem:[%s1 + $0x200] sm:$0xff]
    %v88 = vld [vmem:[%s1 + $0x208] sm:$0xff]
    %v89 = vld [vmem:[%s1 + $0x210] sm:$0xff]
    %v90 = vld [vmem:[%s1 + $0x218] sm:$0xff]
    %v91 = vld [vmem:[%s1 + $0x220] sm:$0xff]
    %v92 = vld [vmem:[%s1 + $0x228] sm:$0xff]
    %v93 = vld [vmem:[%s1 + $0x230] sm:$0xff]
    %v94 = vld [vmem:[%s1 + $0x238] sm:$0xff]
    %v95 = vld [vmem:[%s1 + $0x240] sm:$0xff]
    %v96 = vld [vmem:[%s1 + $0x248] sm:$0xff]
    %v97 = vld [vmem:[%s1 + $0x250] sm:$0xff]
    %v98 = vld [vmem:[%s1 + $0x258] sm:$0xff]
    %v99 = vld [vmem:[%s1 + $0x260] sm:$0xff]
    %v100 = vld [vmem:[%s1 + $0x268] sm:$0xff]
    %v101 = vld [vmem:[%s1 + $0x270] sm:$0xff]
    %v102 = vld [vmem:[%s1 + $0x278] sm:$0xff]
    %v103 = vld [vmem:[%s1 + $0x280] sm:$0xff]
    %v104 = vld [vmem:[%s1 + $0x288] sm:$0xff]
    %v105 = vld [vmem:[%s1 + $0x290] sm:$0xff]
    %v106 = vld [vmem:[%s1 + $0x298] sm:$0xff]
    %v107 = vld [vmem:[%s1 + $0x2a0] sm:$0xff]
    %v108 = vld [vmem:[%s1 + $0x2a8] sm:$0xff]
    %v109 = vld [vmem:[%s1 + $0x2b0] sm:$0xff]
    %v110 = vld [vmem:[%s1 + $0x2b8] sm:$0xff]
    %v111 = vld [vmem:[%s1 + $0x2c0] sm:$0xff]
    %v112 = vld [vmem:[%s1 + $0x2c8] sm:$0xff]
    %v113 = vld [vmem:[%s1 + $0x2d0] sm:$0xff]
    %v114 = vld [vmem:[%s1 + $0x2d8] sm:$0xff]
    %v115 = vld [vmem:[%s1 + $0x2e0] sm:$0xff]
    %v116 = vld [vmem:[%s1 + $0x2e8] sm:$0xff]
    %v117 = vld [vmem:[%s1 + $0x2f0] sm:$0xff]
    %v118 = vld [vmem:[%s1 + $0x2f8] sm:$0xff]
    %v119 = vld [vmem:[%s1 + $0x300] sm:$0xff]
    %v120 = vld [vmem:[%s1 + $0x308] sm:$0xff]
    %v121 = vld [vmem:[%s1 + $0x310] sm:$0xff]
    %v122 = vld [vmem:[%s1 + $0x318] sm:$0xff]
    %v123 = vld [vmem:[%s1 + $0x320] sm:$0xff]
    %v124 = vld [vmem:[%s1 + $0x328] sm:$0xff]
    %v125 = vld [vmem:[%s1 + $0x330] sm:$0xff]
    %v126 = vld [vmem:[%s1 + $0x338] sm:$0xff]
    %v127 = vld [vmem:[%s1 + $0x340] sm:$0xff]
    %v128 = vld [vmem:[%s1 + $0x348] sm:$0xff]
    %v129 = vld [vmem:[%s1 + $0x350] sm:$0xff]
    %v130 = vld [vmem:[%s1 + $0x358] sm:$0xff]
    %v131 = vld [vmem:[%s1 + $0x360] sm:$0xff]
    %v132 = vld [vmem:[%s1 + $0x368] sm:$0xff]
    %v133 = vld [vmem:[%s1 + $0x370] sm:$0xff]
    %v134 = vld [vmem:[%s1 + $0x378] sm:$0xff]
    %v135 = vld [vmem:[%s1 + $0x380] sm:$0xff]
    %v136 = vld [vmem:[%s1 + $0x388] sm:$0xff]
    %v137 = vld [vmem:[%s1 + $0x390] sm:$0xff]
    %v138 = vld [vmem:[%s1 + $0x398] sm:$0xff]
    %v139 = vld [vmem:[%s1 + $0x3a0] sm:$0xff]
    %v140 = vld [vmem:[%s1 + $0x3a8] sm:$0xff]
    %v141 = vld [vmem:[%s1 + $0x3b0] sm:$0xff]
    %v142 = vld [vmem:[%s1 + $0x3b8] sm:$0xff]
    %v143 = vld [vmem:[%s1 + $0x3c0] sm:$0xff]
    %v144 = vld [vmem:[%s1 + $0x3c8] sm:$0xff]
    %v145 = vld [vmem:[%s1 + $0x3d0] sm:$0xff]
    %v146 = vld [vmem:[%s1 + $0x3d8] sm:$0xff]
    %v147 = vld [vmem:[%s1 + $0x3e0] sm:$0xff]
    %v148 = vld [vmem:[%s1 + $0x3e8] sm:$0xff]
    %v149 = vld [vmem:[%s1 + $0x3f0] sm:$0xff]
    %v150 = vld [vmem:[%s1 + $0x3f8] sm:$0xff]
    %v151 = vld [vmem:[%s2] sm:$0x1]
    %v153 = vlaneseq
    %v154 = vshrl.u32 %v153, 7
    %v155 = vsub.s32 0, %v154
    %v156 = vrot.slane %v151, %v155
    %158 = vmatprep.subr.mxu0 0.0
    %159 = vmatpush1.msra.mxu0 %v23
    %160 = vmatprep.subr.mxu0 0.0
    %161 = vmatpush1.msra.mxu0 %v24
    %162 = vmatprep.subr.mxu0 0.0
    %163 = vmatpush1.msra.mxu0 %v25
    %164 = vmatprep.subr.mxu0 0.0
    %165 = vmatpush1.msra.mxu0 %v26
    %166 = vmatprep.subr.mxu0 0.0
    %167 = vmatpush1.msra.mxu0 %v27
    %168 = vmatprep.subr.mxu0 0.0
    %169 = vmatpush1.msra.mxu0 %v28
    %170 = vmatprep.subr.mxu0 0.0
    %171 = vmatpush1.msra.mxu0 %v29
    %172 = vmatprep.subr.mxu0 0.0
    %173 = vmatpush1.msra.mxu0 %v30
    %174 = vmatprep.subr.mxu0 0.0
    %175 = vmatpush1.msra.mxu0 %v31
    %176 = vmatprep.subr.mxu0 0.0
    %177 = vmatpush1.msra.mxu0 %v32
    %178 = vmatprep.subr.mxu0 0.0
    %179 = vmatpush1.msra.mxu0 %v33
    %180 = vmatprep.subr.mxu0 0.0
    %181 = vmatpush1.msra.mxu0 %v34
    %182 = vmatprep.subr.mxu0 0.0
    %183 = vmatpush1.msra.mxu0 %v35
    %184 = vmatprep.subr.mxu0 0.0
    %185 = vmatpush1.msra.mxu0 %v36
    %186 = vmatprep.subr.mxu0 0.0
    %187 = vmatpush1.msra.mxu0 %v37
    %188 = vmatprep.subr.mxu0 0.0
    %189 = vmatpush1.msra.mxu0 %v38
    %190 = vmatprep.subr.mxu0 0.0
    %191 = vmatpush1.msra.mxu0 %v39
    %192 = vmatprep.subr.mxu0 0.0
    %193 = vmatpush1.msra.mxu0 %v40
    %194 = vmatprep.subr.mxu0 0.0
    %195 = vmatpush1.msra.mxu0 %v41
    %196 = vmatprep.subr.mxu0 0.0
    %197 = vmatpush1.msra.mxu0 %v42
    %198 = vmatprep.subr.mxu0 0.0
    %199 = vmatpush1.msra.mxu0 %v43
    %200 = vmatprep.subr.mxu0 0.0
    %201 = vmatpush1.msra.mxu0 %v44
    %202 = vmatprep.subr.mxu0 0.0
    %203 = vmatpush1.msra.mxu0 %v45
    %204 = vmatprep.subr.mxu0 0.0
    %205 = vmatpush1.msra.mxu0 %v46
    %206 = vmatprep.subr.mxu0 0.0
    %207 = vmatpush1.msra.mxu0 %v47
    %208 = vmatprep.subr.mxu0 0.0
    %209 = vmatpush1.msra.mxu0 %v48
    %210 = vmatprep.subr.mxu0 0.0
    %211 = vmatpush1.msra.mxu0 %v49
    %212 = vmatprep.subr.mxu0 0.0
    %213 = vmatpush1.msra.mxu0 %v50
    %214 = vmatprep.subr.mxu0 0.0
    %215 = vmatpush1.msra.mxu0 %v51
    %216 = vmatprep.subr.mxu0 0.0
    %217 = vmatpush1.msra.mxu0 %v52
    %218 = vmatprep.subr.mxu0 0.0
    %219 = vmatpush1.msra.mxu0 %v53
    %220 = vmatprep.subr.mxu0 0.0
    %221 = vmatpush1.msra.mxu0 %v54
    %222 = vmatprep.mubr.f32.mxu0 %v16
    %223 = vmatmul.mubr.f32.gmra.mrb[0].mxu0 %v15
    %v224 = vpop.f32.mrb[0].mxu0
    %v225 = vadd.f32 %v156, %v224
    %v226 = vpop.f32.mrb[0].mxu0
    %227 = vdwg.mxu0
    %228 = vmatprep.subr.mxu0 0.0
    %229 = vmatpush1.msra.mxu0 %v55
    %230 = vmatprep.subr.mxu0 0.0
    %231 = vmatpush1.msra.mxu0 %v56
    %232 = vmatprep.subr.mxu0 0.0
    %233 = vmatpush1.msra.mxu0 %v57
    %234 = vmatprep.subr.mxu0 0.0
    %235 = vmatpush1.msra.mxu0 %v58
    %236 = vmatprep.subr.mxu0 0.0
    %237 = vmatpush1.msra.mxu0 %v59
    %238 = vmatprep.subr.mxu0 0.0
    %239 = vmatpush1.msra.mxu0 %v60
    %240 = vmatprep.subr.mxu0 0.0
    %241 = vmatpush1.msra.mxu0 %v61
    %242 = vmatprep.subr.mxu0 0.0
    %243 = vmatpush1.msra.mxu0 %v62
    %244 = vmatprep.subr.mxu0 0.0
    %245 = vmatpush1.msra.mxu0 %v63
    %246 = vmatprep.subr.mxu0 0.0
    %247 = vmatpush1.msra.mxu0 %v64
    %248 = vmatprep.subr.mxu0 0.0
    %249 = vmatpush1.msra.mxu0 %v65
    %250 = vmatprep.subr.mxu0 0.0
    %251 = vmatpush1.msra.mxu0 %v66
    %252 = vmatprep.subr.mxu0 0.0
    %253 = vmatpush1.msra.mxu0 %v67
    %254 = vmatprep.subr.mxu0 0.0
    %255 = vmatpush1.msra.mxu0 %v68
    %256 = vmatprep.subr.mxu0 0.0
    %257 = vmatpush1.msra.mxu0 %v69
    %258 = vmatprep.subr.mxu0 0.0
    %259 = vmatpush1.msra.mxu0 %v70
    %260 = vmatprep.subr.mxu0 0.0
    %261 = vmatpush1.msra.mxu0 %v71
    %262 = vmatprep.subr.mxu0 0.0
    %263 = vmatpush1.msra.mxu0 %v72
    %264 = vmatprep.subr.mxu0 0.0
    %265 = vmatpush1.msra.mxu0 %v73
    %266 = vmatprep.subr.mxu0 0.0
    %267 = vmatpush1.msra.mxu0 %v74
    %268 = vmatprep.subr.mxu0 0.0
    %269 = vmatpush1.msra.mxu0 %v75
    %270 = vmatprep.subr.mxu0 0.0
    %271 = vmatpush1.msra.mxu0 %v76
    %272 = vmatprep.subr.mxu0 0.0
    %273 = vmatpush1.msra.mxu0 %v77
    %274 = vmatprep.subr.mxu0 0.0
    %275 = vmatpush1.msra.mxu0 %v78
    %276 = vmatprep.subr.mxu0 0.0
    %277 = vmatpush1.msra.mxu0 %v79
    %278 = vmatprep.subr.mxu0 0.0
    %279 = vmatpush1.msra.mxu0 %v80
    %280 = vmatprep.subr.mxu0 0.0
    %281 = vmatpush1.msra.mxu0 %v81
    %282 = vmatprep.subr.mxu0 0.0
    %283 = vmatpush1.msra.mxu0 %v82
    %284 = vmatprep.subr.mxu0 0.0
    %285 = vmatpush1.msra.mxu0 %v83
    %286 = vmatprep.subr.mxu0 0.0
    %287 = vmatpush1.msra.mxu0 %v84
    %288 = vmatprep.subr.mxu0 0.0
    %289 = vmatpush1.msra.mxu0 %v85
    %290 = vmatprep.subr.mxu0 0.0
    %291 = vmatpush1.msra.mxu0 %v86
    %292 = vmatprep.mubr.f32.mxu0 %v18
    %293 = vmatmul.mubr.f32.gmra.mrb[0].mxu0 %v17
    %v294 = vpop.f32.mrb[0].mxu0
    %v295 = vadd.f32 %v225, %v294
    %v296 = vpop.f32.mrb[0].mxu0
    %297 = vdwg.mxu0
    %298 = vmatprep.subr.mxu0 0.0
    %299 = vmatpush1.msra.mxu0 %v87
    %300 = vmatprep.subr.mxu0 0.0
    %301 = vmatpush1.msra.mxu0 %v88
    %302 = vmatprep.subr.mxu0 0.0
    %303 = vmatpush1.msra.mxu0 %v89
    %304 = vmatprep.subr.mxu0 0.0
    %305 = vmatpush1.msra.mxu0 %v90
    %306 = vmatprep.subr.mxu0 0.0
    %307 = vmatpush1.msra.mxu0 %v91
    %308 = vmatprep.subr.mxu0 0.0
    %309 = vmatpush1.msra.mxu0 %v92
    %310 = vmatprep.subr.mxu0 0.0
    %311 = vmatpush1.msra.mxu0 %v93
    %312 = vmatprep.subr.mxu0 0.0
    %313 = vmatpush1.msra.mxu0 %v94
    %314 = vmatprep.subr.mxu0 0.0
    %315 = vmatpush1.msra.mxu0 %v95
    %316 = vmatprep.subr.mxu0 0.0
    %317 = vmatpush1.msra.mxu0 %v96
    %318 = vmatprep.subr.mxu0 0.0
    %319 = vmatpush1.msra.mxu0 %v97
    %320 = vmatprep.subr.mxu0 0.0
    %321 = vmatpush1.msra.mxu0 %v98
    %322 = vmatprep.subr.mxu0 0.0
    %323 = vmatpush1.msra.mxu0 %v99
    %324 = vmatprep.subr.mxu0 0.0
    %325 = vmatpush1.msra.mxu0 %v100
    %326 = vmatprep.subr.mxu0 0.0
    %327 = vmatpush1.msra.mxu0 %v101
    %328 = vmatprep.subr.mxu0 0.0
    %329 = vmatpush1.msra.mxu0 %v102
    %330 = vmatprep.subr.mxu0 0.0
    %331 = vmatpush1.msra.mxu0 %v103
    %332 = vmatprep.subr.mxu0 0.0
    %333 = vmatpush1.msra.mxu0 %v104
    %334 = vmatprep.subr.mxu0 0.0
    %335 = vmatpush1.msra.mxu0 %v105
    %336 = vmatprep.subr.mxu0 0.0
    %337 = vmatpush1.msra.mxu0 %v106
    %338 = vmatprep.subr.mxu0 0.0
    %339 = vmatpush1.msra.mxu0 %v107
    %340 = vmatprep.subr.mxu0 0.0
    %341 = vmatpush1.msra.mxu0 %v108
    %342 = vmatprep.subr.mxu0 0.0
    %343 = vmatpush1.msra.mxu0 %v109
    %344 = vmatprep.subr.mxu0 0.0
    %345 = vmatpush1.msra.mxu0 %v110
    %346 = vmatprep.subr.mxu0 0.0
    %347 = vmatpush1.msra.mxu0 %v111
    %348 = vmatprep.subr.mxu0 0.0
    %349 = vmatpush1.msra.mxu0 %v112
    %350 = vmatprep.subr.mxu0 0.0
    %351 = vmatpush1.msra.mxu0 %v113
    %352 = vmatprep.subr.mxu0 0.0
    %353 = vmatpush1.msra.mxu0 %v114
    %354 = vmatprep.subr.mxu0 0.0
    %355 = vmatpush1.msra.mxu0 %v115
    %356 = vmatprep.subr.mxu0 0.0
    %357 = vmatpush1.msra.mxu0 %v116
    %358 = vmatprep.subr.mxu0 0.0
    %359 = vmatpush1.msra.mxu0 %v117
    %360 = vmatprep.subr.mxu0 0.0
    %361 = vmatpush1.msra.mxu0 %v118
    %362 = vmatprep.mubr.f32.mxu0 %v20
    %363 = vmatmul.mubr.f32.gmra.mrb[0].mxu0 %v19
    %v364 = vpop.f32.mrb[0].mxu0
    %v365 = vadd.f32 %v295, %v364
    %v366 = vpop.f32.mrb[0].mxu0
    %367 = vdwg.mxu0
    %368 = vmatprep.subr.mxu0 0.0
    %369 = vmatpush1.msra.mxu0 %v119
    %370 = vmatprep.subr.mxu0 0.0
    %371 = vmatpush1.msra.mxu0 %v120
    %372 = vmatprep.subr.mxu0 0.0
    %373 = vmatpush1.msra.mxu0 %v121
    %374 = vmatprep.subr.mxu0 0.0
    %375 = vmatpush1.msra.mxu0 %v122
    %376 = vmatprep.subr.mxu0 0.0
    %377 = vmatpush1.msra.mxu0 %v123
    %378 = vmatprep.subr.mxu0 0.0
    %379 = vmatpush1.msra.mxu0 %v124
    %380 = vmatprep.subr.mxu0 0.0
    %381 = vmatpush1.msra.mxu0 %v125
    %382 = vmatprep.subr.mxu0 0.0
    %383 = vmatpush1.msra.mxu0 %v126
    %384 = vmatprep.subr.mxu0 0.0
    %385 = vmatpush1.msra.mxu0 %v127
    %386 = vmatprep.subr.mxu0 0.0
    %387 = vmatpush1.msra.mxu0 %v128
    %388 = vmatprep.subr.mxu0 0.0
    %389 = vmatpush1.msra.mxu0 %v129
    %390 = vmatprep.subr.mxu0 0.0
    %391 = vmatpush1.msra.mxu0 %v130
    %392 = vmatprep.subr.mxu0 0.0
    %393 = vmatpush1.msra.mxu0 %v131
    %394 = vmatprep.subr.mxu0 0.0
    %395 = vmatpush1.msra.mxu0 %v132
    %396 = vmatprep.subr.mxu0 0.0
    %397 = vmatpush1.msra.mxu0 %v133
    %398 = vmatprep.subr.mxu0 0.0
    %399 = vmatpush1.msra.mxu0 %v134
    %400 = vmatprep.subr.mxu0 0.0
    %401 = vmatpush1.msra.mxu0 %v135
    %402 = vmatprep.subr.mxu0 0.0
    %403 = vmatpush1.msra.mxu0 %v136
    %404 = vmatprep.subr.mxu0 0.0
    %405 = vmatpush1.msra.mxu0 %v137
    %406 = vmatprep.subr.mxu0 0.0
    %407 = vmatpush1.msra.mxu0 %v138
    %408 = vmatprep.subr.mxu0 0.0
    %409 = vmatpush1.msra.mxu0 %v139
    %410 = vmatprep.subr.mxu0 0.0
    %411 = vmatpush1.msra.mxu0 %v140
    %412 = vmatprep.subr.mxu0 0.0
    %413 = vmatpush1.msra.mxu0 %v141
    %414 = vmatprep.subr.mxu0 0.0
    %415 = vmatpush1.msra.mxu0 %v142
    %416 = vmatprep.subr.mxu0 0.0
    %417 = vmatpush1.msra.mxu0 %v143
    %418 = vmatprep.subr.mxu0 0.0
    %419 = vmatpush1.msra.mxu0 %v144
    %420 = vmatprep.subr.mxu0 0.0
    %421 = vmatpush1.msra.mxu0 %v145
    %422 = vmatprep.subr.mxu0 0.0
    %423 = vmatpush1.msra.mxu0 %v146
    %424 = vmatprep.subr.mxu0 0.0
    %425 = vmatpush1.msra.mxu0 %v147
    %426 = vmatprep.subr.mxu0 0.0
    %427 = vmatpush1.msra.mxu0 %v148
    %428 = vmatprep.subr.mxu0 0.0
    %429 = vmatpush1.msra.mxu0 %v149
    %430 = vmatprep.subr.mxu0 0.0
    %431 = vmatpush1.msra.mxu0 %v150
    %432 = vmatprep.mubr.f32.mxu0 %v22
    %433 = vmatmul.mubr.f32.gmra.mrb[0].mxu0 %v21
    %v434 = vpop.f32.mrb[0].mxu0
    %v435 = vadd.f32 %v365, %v434
    %v436 = vpop.f32.mrb[0].mxu0
    %437 = vdwg.mxu0
    %vm438 = vcmask 80896
    %v439 = vsel %vm438, %v435, -inf
    %440 = vmax.xlane.f32.xlu0 %v439
    %v441 = vpop.xlane.xlu0 %440
    %v442 = vsub.f32 %v435, %v441
    %v443 = vmul.f32 %v442, 1.442695
    %v444 = vpow.pop %v443
    %v445 = vsel %vm438, %v444, 0.0
    %446 = vadd.xlane.f32.xlu0 %v445
    %v447 = vpop.xlane.xlu0 %446
    %v448 = vlog2.pop %v447
    %v449 = vmul.f32 %v448, 0.6931472
    %v450 = vsub.f32 %v442, %v449
    %451 = vst.msk [vmem:[#allocation2] sm:$0xff] %vm438, %v450
    // Predicated region
    $region14: #{tpu_custom_call.1} parent=1 // pred_check
      _
    $region15: #{tpu_custom_call.1} parent=1 // pred_check_branch
      %453 = sbr.rel (0) target = $region17
    $region16: #{tpu_custom_call.1} parent=1 // pred_region
      %s455 = ssub.s32 128, 128
      %456 = vsyncadd [#allocation3], %s455
      %s458 = sshll.u32 [#allocation2], 4
      %s459 = int_to_ptr.vmem [resolvable:$true] %s458
      %461 = dma.vmem_to_hbm [thread:$0]  %s459, 128, %s3, [#allocation3]
    $region17: #{tpu_custom_call.1} parent=1 // pred_fallthru
      _
    // Predicated region
    $region18: #{tpu_custom_call.1} parent=1 // pred_check
      _
    $region19: #{tpu_custom_call.1} parent=1 // pred_check_branch
      %463 = sbr.rel (0) target = $region21
    $region20: #{tpu_custom_call.1} parent=1 // pred_region
      %464 = dma.done [#allocation3], 128
    $region21: #{tpu_custom_call.1} parent=1 // pred_fallthru
      _
    %465 = vsyncpa [#allocation3], 1

</llo_original>
